<compile_context>
chip_gen: v7x
topology: tpu7x:2x2x1
jax: 0.10.0
libtpu: 0.0.40
codegen_flags: <defaults>
</compile_context>

<pallas_src>
import functools

import jax
import jax.numpy as jnp
from jax.experimental import pallas as pl
from jax.experimental.pallas import tpu as pltpu

_LANES = 128
_SUBLANES = 8
# 512 rows of bf16 activations (C up to ~4K) double-buffered stays well inside
# v5e's 16 MiB default scoped VMEM; also fine on v6e/v7x.
_MAX_TILE_N = 512


def _round_up(v, m):
    return (v + m - 1) // m * m


def _predictor_kernel(x_ref, w_ref, b_ref, out_ref):
    # x_ref: (TILE_N, C) bf16 ; w_ref: (C, OUT_PAD) bf16 ; b_ref: (1, OUT_PAD) f32
    # out_ref: (TILE_N, OUT_PAD) f32
    acc = jnp.dot(x_ref[...], w_ref[...], preferred_element_type=jnp.float32)
    out_ref[...] = (acc + b_ref[...]).astype(out_ref.dtype)


def prepare_fused_params(cls_w, cls_b, bbox_w, bbox_b,
                         compute_dtype=jnp.bfloat16):
    """Hoisted, call once per model (not per forward).

    cls_w: (num_classes, C), cls_b: (num_classes,)       -- PyTorch nn.Linear layout
    bbox_w: (4*num_classes, C), bbox_b: (4*num_classes,)
    Returns fused (C, OUT_PAD) weight (compute_dtype), (1, OUT_PAD) f32 bias,
    num_classes, num_bbox.
    """
    num_classes = int(cls_w.shape[0])
    num_bbox = int(bbox_w.shape[0])
    out_total = num_classes + num_bbox
    out_pad = _round_up(out_total, _LANES)

    w = jnp.concatenate([cls_w.T, bbox_w.T], axis=1)            # (C, out_total)
    w = jnp.pad(w, ((0, 0), (0, out_pad - out_total)))
    b = jnp.concatenate([cls_b, bbox_b], axis=0)
    b = jnp.pad(b, (0, out_pad - out_total)).reshape(1, out_pad)
    return w.astype(compute_dtype), b.astype(jnp.float32), num_classes, num_bbox


@functools.partial(jax.jit, static_argnames=("num_classes", "num_bbox"))
def fast_rcnn_predictor_fused(x, fused_w, fused_b, *, num_classes, num_bbox):
    """Pallas-backed FastRCNNPredictor.forward using pre-fused params.

    x: (N, C, 1, 1) or (N, C)
    returns (scores (N, num_classes) f32, bbox_deltas (N, 4*num_classes) f32)
    """
    if x.ndim == 4:
        assert x.shape[2] == 1 and x.shape[3] == 1, "spatial dims must be [1, 1]"
    x2d = x.reshape(x.shape[0], -1)                    # torch.flatten(x, 1)
    n, c = x2d.shape
    out_pad = fused_w.shape[1]
    compute_dtype = fused_w.dtype
    x2d = x2d.astype(compute_dtype)

    # Tile N; pad rows so the grid divides evenly (padded rows are trimmed).
    tile_n = min(_MAX_TILE_N, _round_up(n, _SUBLANES))
    n_pad = _round_up(n, tile_n)
    if n_pad != n:
        x2d = jnp.pad(x2d, ((0, n_pad - n), (0, 0)))
    grid = (n_pad // tile_n,)

    itemsize = jnp.dtype(compute_dtype).itemsize
    cost = pl.CostEstimate(
        flops=2 * n_pad * c * out_pad,
        transcendentals=0,
        bytes_accessed=(n_pad * c * itemsize
                        + c * out_pad * itemsize
                        + out_pad * 4
                        + n_pad * out_pad * 4),
    )
    # Double-buffered x/out tiles + (conservatively double-counted) resident params.
    vmem_bytes = (2 * tile_n * c * itemsize
                  + 2 * tile_n * out_pad * 4
                  + 2 * (c * out_pad * itemsize + out_pad * 4))
    vmem_limit = int(min(max(2 * vmem_bytes, 16 * 1024 * 1024), 48 * 1024 * 1024))

    out = pl.pallas_call(
        _predictor_kernel,
        out_shape=jax.ShapeDtypeStruct((n_pad, out_pad), jnp.float32),
        grid=grid,
        in_specs=[
            pl.BlockSpec((tile_n, c), lambda i: (i, 0)),      # x: tiled on N
            pl.BlockSpec((c, out_pad), lambda i: (0, 0)),     # fused weight: resident
            pl.BlockSpec((1, out_pad), lambda i: (0, 0)),     # fused bias: resident
        ],
        out_specs=pl.BlockSpec((tile_n, out_pad), lambda i: (i, 0)),
        compiler_params=pltpu.CompilerParams(
            dimension_semantics=("parallel",),                 # v7x: both TCs
            vmem_limit_bytes=vmem_limit,
        ),
        cost_estimate=cost,
    )(x2d, fused_w, fused_b)

    scores = out[:n, :num_classes]
    bbox_deltas = out[:n, num_classes:num_classes + num_bbox]
    return scores, bbox_deltas


def _init_linear(key, out_features, in_features):
    # Deterministic, PyTorch-nn.Linear-style uniform(-1/sqrt(in), 1/sqrt(in)).
    kw, kb = jax.random.split(key)
    bound = 1.0 / jnp.sqrt(jnp.float32(in_features))
    w = jax.random.uniform(kw, (out_features, in_features), jnp.float32,
                           minval=-bound, maxval=bound)
    b = jax.random.uniform(kb, (out_features,), jnp.float32,
                           minval=-bound, maxval=bound)
    return w, b


if __name__ == "__main__":
    # Small shapes consistent with the module: pooled ROI features (N, C, 1, 1).
    N = 8
    in_channels = 32
    num_classes = 5  # including background

    key = jax.random.PRNGKey(0)
    kx, kc, kb = jax.random.split(key, 3)

    x = jax.random.normal(kx, (N, in_channels, 1, 1), jnp.float32)
    cls_w, cls_b = _init_linear(kc, num_classes, in_channels)
    bbox_w, bbox_b = _init_linear(kb, num_classes * 4, in_channels)

    # One-time (per model) fused-parameter preparation, hoisted off the forward path.
    fused_w, fused_b, nc, nb = prepare_fused_params(cls_w, cls_b, bbox_w, bbox_b)

    scores, bbox_deltas = fast_rcnn_predictor_fused(
        x, fused_w, fused_b, num_classes=nc, num_bbox=nb)
    jax.block_until_ready((scores, bbox_deltas))

    # --- References ---
    x2d = x.reshape(N, -1)
    # Tight check against the same bf16-rounded operands with f32 accumulation.
    x_bf = x2d.astype(jnp.bfloat16).astype(jnp.float32)
    wc_bf = cls_w.astype(jnp.bfloat16).astype(jnp.float32)
    wb_bf = bbox_w.astype(jnp.bfloat16).astype(jnp.float32)
    ref_scores_bf = x_bf @ wc_bf.T + cls_b
    ref_bbox_bf = x_bf @ wb_bf.T + bbox_b
    # Loose semantic check against the full-f32 PyTorch-equivalent reference.
    ref_scores = x2d @ cls_w.T + cls_b
    ref_bbox = x2d @ bbox_w.T + bbox_b

    assert scores.shape == (N, num_classes)
    assert bbox_deltas.shape == (N, num_classes * 4)
    assert jnp.allclose(scores, ref_scores_bf, atol=1e-3, rtol=1e-3)
    assert jnp.allclose(bbox_deltas, ref_bbox_bf, atol=1e-3, rtol=1e-3)
    assert jnp.allclose(scores, ref_scores, atol=5e-2, rtol=5e-2)
    assert jnp.allclose(bbox_deltas, ref_bbox, atol=5e-2, rtol=5e-2)

    print("KERNEL_OK")
</pallas_src>

<mosaic_0001>
module attributes {stable_mosaic.version = 11 : i64} {
  func.func @_predictor_kernel(%arg0: i32, %arg1: memref<8x32xbf16, #tpu.memory_space<vmem>>, %arg2: memref<32x128xbf16, #tpu.memory_space<vmem>>, %arg3: memref<1x128xf32, #tpu.memory_space<vmem>>, %arg4: memref<8x128xf32, #tpu.memory_space<vmem>>) attributes {dimension_semantics = [#tpu.dimension_semantics<parallel>], iteration_bounds = array<i64: 1>, scalar_prefetch = 0 : i64, scratch_operands = 0 : i64, tpu.core_type = #tpu.core_type<tc>, window_params = [{transform_indices = @transform_0, window_bounds = array<i64: 8, 32>}, {pipeline_mode = #tpu.pipeline_mode<synchronous>, transform_indices = @transform_1, window_bounds = array<i64: 32, 128>}, {pipeline_mode = #tpu.pipeline_mode<synchronous>, transform_indices = @transform_2, window_bounds = array<i64: 1, 128>}, {transform_indices = @transform_3, window_bounds = array<i64: 8, 128>}]} {
    %c0 = arith.constant 0 : index
    %c0_0 = arith.constant 0 : index
    %0 = vector.load %arg1[%c0, %c0_0] : memref<8x32xbf16, #tpu.memory_space<vmem>>, vector<8x32xbf16>
    %c0_1 = arith.constant 0 : index
    %c0_2 = arith.constant 0 : index
    %1 = vector.load %arg2[%c0_1, %c0_2] : memref<32x128xbf16, #tpu.memory_space<vmem>>, vector<32x128xbf16>
    %cst = arith.constant dense<0.000000e+00> : vector<8x128xf32>
    %2 = tpu.matmul %0, %1, %cst {dimension_numbers = #tpu.dot_dimension_numbers<[1], [0], [0], [1], [0, 0, 1, 1], [], []>} : vector<8x32xbf16>, vector<32x128xbf16>, vector<8x128xf32> -> vector<8x128xf32>
    %c0_3 = arith.constant 0 : index
    %c0_4 = arith.constant 0 : index
    %3 = vector.load %arg3[%c0_3, %c0_4] : memref<1x128xf32, #tpu.memory_space<vmem>>, vector<1x128xf32>
    %4 = vector.broadcast %3 : vector<1x128xf32> to vector<8x128xf32>
    %5 = arith.addf %2, %4 : vector<8x128xf32>
    %c0_5 = arith.constant 0 : index
    %c0_6 = arith.constant 0 : index
    %6 = vector.load %arg4[%c0_5, %c0_6] : memref<8x128xf32, #tpu.memory_space<vmem>>, vector<8x128xf32>
    tpu.vector_store %arg4[%c0_5, %c0_6], %5 {strides = array<i32>} : memref<8x128xf32, #tpu.memory_space<vmem>>, vector<8x128xf32>,
    return
  }
  func.func @transform_0(%arg0: i32) -> (i32, i32) {
    %c0_i32 = arith.constant 0 : i32
    %c0_i32_0 = arith.constant 0 : i32
    return %arg0, %c0_i32 : i32, i32
  }
  func.func @transform_1(%arg0: i32) -> (i32, i32) {
    %c0_i32 = arith.constant 0 : i32
    %c0_i32_0 = arith.constant 0 : i32
    %c0_i32_1 = arith.constant 0 : i32
    return %c0_i32, %c0_i32_0 : i32, i32
  }
  func.func @transform_2(%arg0: i32) -> (i32, i32) {
    %c0_i32 = arith.constant 0 : i32
    %c0_i32_0 = arith.constant 0 : i32
    %c0_i32_1 = arith.constant 0 : i32
    return %c0_i32, %c0_i32_0 : i32, i32
  }
  func.func @transform_3(%arg0: i32) -> (i32, i32) {
    %c0_i32 = arith.constant 0 : i32
    %c0_i32_0 = arith.constant 0 : i32
    return %arg0, %c0_i32 : i32, i32
  }
}

</mosaic_0001>

<llo_original>
// kernel: fast_rcnn_predictor_fused.1
$region0: #{fast_rcnn_predictor_fused.1}
  #allocation0 [shape = 'u32[]', space=smem, size = 0x4, offset = 0x4, fixed_abs, tag = 'smem constant byte address 0x4 - core index']
  #allocation1 [shape = 'u32[144,128]{1,0:T(1,128)}', space=vmem, size = 0x12000, scoped, tag = 'internal scratch']
  %s0 = inlined_call_operand.vmem [shape: bf16[8,32], index: 0, kind: input, shape index: {}]
  %s1 = inlined_call_operand.vmem [shape: bf16[32,128], index: 1, kind: input, shape index: {}]
  %s2 = inlined_call_operand.vmem [shape: f32[1,128], index: 2, kind: input, shape index: {}]
  %s3 = inlined_call_operand.vmem [shape: f32[8,128], index: 3, kind: output, shape index: {}]
  %s4 = sld [smem:[#allocation0]]
  $region22: #{fast_rcnn_predictor_fused.1} parent=0
    _
  %s6 = ssub.s32 1, %s4
  %s7 = scalar_select 0, %s6, %s4
  // Predicated region
  $region2: #{fast_rcnn_predictor_fused.1} parent=0 // pred_check
    _
  $region3: #{fast_rcnn_predictor_fused.1} parent=0 // pred_check_branch
    %9 = sbr.rel (0) target = $region5
  $region4: #{fast_rcnn_predictor_fused.1} parent=0 // pred_region
    _
  $region5: #{fast_rcnn_predictor_fused.1} parent=0 // pred_fallthru
    _
  // Predicated region
  $region6: #{fast_rcnn_predictor_fused.1} parent=0 // pred_check
    _
  $region7: #{fast_rcnn_predictor_fused.1} parent=0 // pred_check_branch
    %11 = sbr.rel (0) target = $region9
  $region8: #{fast_rcnn_predictor_fused.1} parent=0 // pred_region
    _
  $region9: #{fast_rcnn_predictor_fused.1} parent=0 // pred_fallthru
    _
  // Predicated region
  $region10: #{fast_rcnn_predictor_fused.1} parent=0 // pred_check
    _
  $region11: #{fast_rcnn_predictor_fused.1} parent=0 // pred_check_branch
    %13 = sbr.rel (0) target = $region13
  $region12: #{fast_rcnn_predictor_fused.1} parent=0 // pred_region
    _
  $region13: #{fast_rcnn_predictor_fused.1} parent=0 // pred_fallthru
    _
  %v15 = vld [vmem:[%s0] sm:$0xf]
  %v16 = vld [vmem:[%s1] sm:$0xf]
  %v17 = vld [vmem:[%s1 + $0x4] sm:$0xf]
  %v18 = vld [vmem:[%s1 + $0x8] sm:$0xf]
  %v19 = vld [vmem:[%s1 + $0xc] sm:$0xf]
  %v20 = vld [vmem:[%s2] sm:$0x1]
  %v22 = vlaneseq
  %v23 = vshrl.u32 %v22, 7
  %v24 = vsub.s32 0, %v23
  %v25 = vrot.slane %v20, %v24
  %v31 = vunpack.c.l.b16 %v16
  %v32 = vunpack.c.l.b16 %v17
  %v33 = vunpack.c.l.b16 %v18
  %v34 = vunpack.c.l.b16 %v19
  %v35 = vpack.c.b16 %v32, %v31
  %v36 = vpack.c.b16 %v34, %v33
  %vm39 = vcmask 261120
  %v41 = vsel %vm39, %v15, 0
  %43 = vmatprep.subr.bf16.mxu0 0
  %44 = vmatpush1.bf16.msra.mxu0 %v35
  %45 = vmatprep.subr.bf16.mxu0 0
  %46 = vmatpush1.bf16.msra.mxu0 %v36
  %47 = vmatprep.subr.bf16.mxu0 0
  %48 = vmatpush1.bf16.msra.mxu0 0
  %49 = vmatprep.subr.bf16.mxu0 0
  %50 = vmatpush1.bf16.msra.mxu0 0
  %51 = vmatprep.subr.bf16.mxu0 0
  %52 = vmatpush1.bf16.msra.mxu0 0
  %53 = vmatprep.subr.bf16.mxu0 0
  %54 = vmatpush1.bf16.msra.mxu0 0
  %55 = vmatprep.subr.bf16.mxu0 0
  %56 = vmatpush1.bf16.msra.mxu0 0
  %57 = vmatprep.subr.bf16.mxu0 0
  %58 = vmatpush1.bf16.msra.mxu0 0
  %59 = vmatprep.subr.bf16.mxu0 0
  %60 = vmatpush1.bf16.msra.mxu0 0
  %61 = vmatprep.subr.bf16.mxu0 0
  %62 = vmatpush1.bf16.msra.mxu0 0
  %63 = vmatprep.subr.bf16.mxu0 0
  %64 = vmatpush1.bf16.msra.mxu0 0
  %65 = vmatprep.subr.bf16.mxu0 0
  %66 = vmatpush1.bf16.msra.mxu0 0
  %67 = vmatprep.subr.bf16.mxu0 0
  %68 = vmatpush1.bf16.msra.mxu0 0
  %69 = vmatprep.subr.bf16.mxu0 0
  %70 = vmatpush1.bf16.msra.mxu0 0
  %71 = vmatprep.subr.bf16.mxu0 0
  %72 = vmatpush1.bf16.msra.mxu0 0
  %73 = vmatprep.subr.bf16.mxu0 0
  %74 = vmatpush1.bf16.msra.mxu0 0
  %75 = vmatprep.mubr.bf16.mxu0 0
  %76 = vmatmul.mubr.bf16.gmra.mrb[0].mxu0 %v41
  %v77 = vpop.f32.mrb[0].mxu0
  %v78 = vadd.f32 %v25, %v77
  %v79 = vpop.f32.mrb[0].mxu0
  %v80 = vpop.f32.mrb[0].mxu0
  %v81 = vpop.f32.mrb[0].mxu0
  %82 = vdwg.mxu0
  %83 = vst [vmem:[%s3] sm:$0xff] %v78
  // Predicated region
  $region14: #{fast_rcnn_predictor_fused.1} parent=0 // pred_check
    _
  $region15: #{fast_rcnn_predictor_fused.1} parent=0 // pred_check_branch
    %85 = sbr.rel (0) target = $region17
  $region16: #{fast_rcnn_predictor_fused.1} parent=0 // pred_region
    _
  $region17: #{fast_rcnn_predictor_fused.1} parent=0 // pred_fallthru
    _
  // Predicated region
  $region18: #{fast_rcnn_predictor_fused.1} parent=0 // pred_check
    _
  $region19: #{fast_rcnn_predictor_fused.1} parent=0 // pred_check_branch
    %87 = sbr.rel (0) target = $region21
  $region20: #{fast_rcnn_predictor_fused.1} parent=0 // pred_region
    _
  $region21: #{fast_rcnn_predictor_fused.1} parent=0 // pred_fallthru
    _

</llo_original>
